<compile_context>
chip_gen: v7x
topology: tpu7x:2x2x1
jax: 0.10.0
libtpu: 0.0.40
codegen_flags: <defaults>
</compile_context>

<pallas_src>
import functools

import jax
import jax.numpy as jnp
from jax.experimental import pallas as pl
from jax.experimental.pallas import tpu as pltpu


def _round_up(x: int, m: int) -> int:
    return ((x + m - 1) // m) * m


def _vmem_capacity_bytes() -> int:
    """Physical VMEM of the attached TPU (per TensorCore); conservative fallback."""
    try:
        return int(pltpu.get_tpu_info().vmem_capacity_bytes)
    except Exception:
        return 64 * 1024 * 1024  # v7x-sized fallback (smallest current generation)


def _num_tensorcores() -> int:
    """Best-effort TensorCores-per-chip (v7x has 2; v5e/v6e have 1)."""
    try:
        kind = str(getattr(jax.devices()[0], "device_kind", "")).lower()
        if "v7" in kind:
            return 2
    except Exception:
        pass
    return 1


# -----------------------------------------------------------------------------
# Kernels
# -----------------------------------------------------------------------------
def _linear_kernel(x_ref, w_ref, b_ref, o_ref, *, compute_dtype):
    """grid_k == 1 path: whole reduction resident, no accumulator scratch."""
    x = x_ref[...]
    w = w_ref[...]
    if compute_dtype is not None:
        # Cast on the loaded tile (MXU input rate) — never a wrapper-side HBM pass.
        x = x.astype(compute_dtype)
        w = w.astype(compute_dtype)
    acc = jnp.dot(x, w, preferred_element_type=jnp.float32)
    o_ref[...] = (acc + b_ref[...]).astype(o_ref.dtype)


def _linear_kernel_ksplit(x_ref, w_ref, b_ref, o_ref, acc_ref, *, compute_dtype):
    """grid_k > 1 path: f32 VMEM accumulator across the (last, arbitrary) K axis."""
    k = pl.program_id(2)

    @pl.when(k == 0)
    def _():
        acc_ref[...] = jnp.zeros_like(acc_ref)

    x = x_ref[...]
    w = w_ref[...]
    if compute_dtype is not None:
        x = x.astype(compute_dtype)
        w = w.astype(compute_dtype)
    acc_ref[...] += jnp.dot(x, w, preferred_element_type=jnp.float32)

    @pl.when(k == pl.num_programs(2) - 1)
    def _():
        # Bias add + final cast in f32 (VPU-friendly on v5e too).
        o_ref[...] = (acc_ref[...] + b_ref[...]).astype(o_ref.dtype)


# -----------------------------------------------------------------------------
# Wrapper
# -----------------------------------------------------------------------------
def video_classifier_forward(x, w_t, b, *, compute_dtype=None,
                             tm=None, tn=None, tk=None):
    """Linear layer forward: returns x @ w_t + b, in x.dtype.

    x:   [..., input_dim]
    w_t: [input_dim, num_classes]  (transposed nn.Linear weight)
    b:   [num_classes]
    compute_dtype: optional MXU input dtype (e.g. jnp.bfloat16); the cast
      happens inside the kernel so x is only read from HBM once.
    """
    orig_shape = x.shape
    K = orig_shape[-1]
    x2 = x.reshape(-1, K)
    B = x2.shape[0]
    K2, N = w_t.shape
    assert K == K2, (K, K2)
    assert b.shape == (N,), b.shape

    out_dtype = x.dtype
    xb = jnp.dtype(x.dtype).itemsize
    wb = jnp.dtype(w_t.dtype).itemsize
    ob = jnp.dtype(out_dtype).itemsize

    # Sublane granularity for the x / output row blocks (packed dtypes need more rows).
    sub = max(8, 32 // xb, 32 // ob)

    N_pad = _round_up(N, 128)          # lane-dense output stores (unmasked vst)

    vmem_cap = _vmem_capacity_bytes()
    budget = int(vmem_cap * 0.7)       # tile-sizing budget; leaves compiler headroom

    def _working_set(tm_, tn_, tk_, with_acc):
        ws = (2 * tm_ * tk_ * xb       # double-buffered x tiles
              + 2 * tk_ * tn_ * wb     # double-buffered weight tiles
              + 2 * tm_ * tn_ * ob     # double-buffered output tiles
              + 2 * tn_ * 4)           # bias row
        if with_acc:
            ws += tm_ * tn_ * 4        # f32 accumulator scratch
        return ws

    # ---- K tile: keep the whole reduction resident whenever it fits. -------
    if tk is None:
        if _working_set(sub, 128, K, False) <= budget:
            tk = K
        else:
            tk = None
            if K % 128 == 0:
                for cand in range(K - 128, 0, -128):     # divisors of K, x128
                    if K % cand == 0 and _working_set(sub, 128, cand, True) <= budget:
                        tk = cand
                        break
            if tk is None:
                # TODO(synk): K has no VMEM-fitting 128-multiple divisor; keep the
                # whole reduction resident rather than padding x along K.
                tk = K
    assert K % tk == 0 and (tk == K or tk % 128 == 0), (K, tk)
    grid_k = K // tk

    # ---- N tile: prefer grid_n == 1 so x is streamed from HBM exactly once.
    if tn is None:
        tn = 128
        lanes = N_pad // 128
        for d in range(lanes, 0, -1):                    # divisors of N_pad, x128
            if lanes % d == 0 and _working_set(sub, d * 128, tk, grid_k > 1) <= budget:
                tn = d * 128
                break
    assert tn % 128 == 0 and N_pad % tn == 0, (tn, N_pad)
    grid_n = N_pad // tn

    # ---- M tile: largest row tile fitting the budget (capped at 512 rows). --
    if tm is None:
        cap_rows = 512
        num_cores = _num_tensorcores()
        # v7x: split the batch across >= 2 parallel row tiles so both
        # TensorCores (each with its own HBM path) get balanced work.
        want_split = num_cores > 1 and grid_n == 1 and B >= 2 * sub
        if (B <= cap_rows and not want_split
                and _working_set(_round_up(B, sub), tn, tk, grid_k > 1) <= budget):
            tm = B                      # one full-extent row block, no padding
        else:
            hi = min(cap_rows, _round_up(B, sub))
            if want_split:
                hi = min(hi, _round_up(-(-B // num_cores), sub))
            tm = sub
            for cand in range(hi, sub - 1, -sub):
                if _working_set(cand, tn, tk, grid_k > 1) <= budget:
                    tm = cand
                    break
            if tm >= B:
                tm = B
    assert tm == B or tm % sub == 0, (tm, B, sub)
    grid_m = pl.cdiv(B, tm)             # ragged last block handled by Pallas masking

    # ---- Pad only the *small* operands (weight / bias) along the class dim. -
    w_p = w_t if N_pad == N else jnp.pad(w_t, ((0, 0), (0, N_pad - N)))
    b_p = b.astype(jnp.float32)
    if N_pad != N:
        b_p = jnp.pad(b_p, (0, N_pad - N))
    b_p = b_p.reshape(1, N_pad)

    ws_bytes = _working_set(tm, tn, tk, grid_k > 1)
    vmem_limit = int(min(vmem_cap * 0.9, ws_bytes + (8 << 20)))

    cost = pl.CostEstimate(
        flops=2 * B * K * N_pad,
        transcendentals=0,
        bytes_accessed=(x2.size * xb + w_p.size * wb + b_p.size * 4
                        + B * N_pad * ob),
    )

    if grid_k == 1:
        kernel = functools.partial(_linear_kernel, compute_dtype=compute_dtype)
        grid = (grid_m, grid_n)
        in_specs = [
            pl.BlockSpec((tm, K), lambda i, j: (i, 0)),      # x row tile
            pl.BlockSpec((K, tn), lambda i, j: (0, j)),      # weight column slab
            pl.BlockSpec((1, tn), lambda i, j: (0, j)),      # bias row
        ]
        out_specs = pl.BlockSpec((tm, tn), lambda i, j: (i, j))
        scratch_shapes = []
        dims = ("parallel", "parallel")
    else:
        kernel = functools.partial(_linear_kernel_ksplit, compute_dtype=compute_dtype)
        grid = (grid_m, grid_n, grid_k)                      # reduction axis last
        in_specs = [
            pl.BlockSpec((tm, tk), lambda i, j, k: (i, k)),
            pl.BlockSpec((tk, tn), lambda i, j, k: (k, j)),
            pl.BlockSpec((1, tn), lambda i, j, k: (0, j)),
        ]
        out_specs = pl.BlockSpec((tm, tn), lambda i, j, k: (i, j))
        scratch_shapes = [pltpu.VMEM((tm, tn), jnp.float32)]
        dims = ("parallel", "parallel", "arbitrary")

    out = pl.pallas_call(
        kernel,
        out_shape=jax.ShapeDtypeStruct((B, N_pad), out_dtype),
        grid_spec=pltpu.PrefetchScalarGridSpec(
            num_scalar_prefetch=0,
            grid=grid,
            in_specs=in_specs,
            out_specs=out_specs,
            scratch_shapes=scratch_shapes,
        ),
        compiler_params=pltpu.CompilerParams(
            dimension_semantics=dims,
            vmem_limit_bytes=vmem_limit,
        ),
        cost_estimate=cost,
    )(x2, w_p, b_p)

    if N_pad != N:
        out = out[:, :N]
    return out.reshape(orig_shape[:-1] + (N,))


if __name__ == "__main__":
    # Pooled video feature vectors: batch=64, input_dim=256, num_classes=16.
    batch, input_dim, num_classes = 64, 256, 16

    key = jax.random.PRNGKey(0)
    kx, kw, kb = jax.random.split(key, 3)

    x = jax.random.normal(kx, (batch, input_dim), dtype=jnp.float32)
    # PyTorch nn.Linear weight is [num_classes, input_dim]; keep its transpose.
    w = jax.random.normal(kw, (num_classes, input_dim), dtype=jnp.float32) * 0.1
    b = jax.random.normal(kb, (num_classes,), dtype=jnp.float32) * 0.1
    w_t = w.T  # [input_dim, num_classes]

    ref = x @ w_t + b

    # f32 path (tight check). At this scale the whole problem is one grid step.
    out_f32 = jax.block_until_ready(video_classifier_forward(x, w_t, b))
    assert out_f32.shape == (batch, num_classes)
    assert jnp.allclose(out_f32, ref, atol=1e-5, rtol=1e-5)

    # In-kernel bf16 cast with f32 accumulation (MXU-rate path on v6e/v7x).
    out_bf16 = jax.block_until_ready(
        video_classifier_forward(x, w_t, b, compute_dtype=jnp.bfloat16))
    assert out_bf16.shape == (batch, num_classes)
    assert jnp.allclose(out_bf16, ref, atol=1e-1, rtol=5e-2)

    # Ragged batch (B not a multiple of the row tile) exercises the unpadded,
    # masked last-row-block path.
    out_rag = jax.block_until_ready(
        video_classifier_forward(x[:50], w_t, b, tm=32))
    assert out_rag.shape == (50, num_classes)
    assert jnp.allclose(out_rag, ref[:50], atol=1e-5, rtol=1e-5)

    print("KERNEL_OK")
</pallas_src>

<mosaic_0001>
module attributes {stable_mosaic.version = 11 : i64} {
  func.func @_linear_kernel(%arg0: i32, %arg1: i32, %arg2: memref<64x256xf32, #tpu.memory_space<vmem>>, %arg3: memref<256x128xf32, #tpu.memory_space<vmem>>, %arg4: memref<1x128xf32, #tpu.memory_space<vmem>>, %arg5: memref<64x128xf32, #tpu.memory_space<vmem>>) attributes {dimension_semantics = [#tpu.dimension_semantics<parallel>, #tpu.dimension_semantics<parallel>], iteration_bounds = array<i64: 1, 1>, scalar_prefetch = 0 : i64, scratch_operands = 0 : i64, tpu.core_type = #tpu.core_type<tc>, window_params = [{transform_indices = @transform_0, window_bounds = array<i64: 64, 256>}, {transform_indices = @transform_1, window_bounds = array<i64: 256, 128>}, {transform_indices = @transform_2, window_bounds = array<i64: 1, 128>}, {transform_indices = @transform_3, window_bounds = array<i64: 64, 128>}]} {
    %c0 = arith.constant 0 : index
    %c0_0 = arith.constant 0 : index
    %0 = vector.load %arg2[%c0, %c0_0] : memref<64x256xf32, #tpu.memory_space<vmem>>, vector<64x256xf32>
    %c0_1 = arith.constant 0 : index
    %c0_2 = arith.constant 0 : index
    %1 = vector.load %arg3[%c0_1, %c0_2] : memref<256x128xf32, #tpu.memory_space<vmem>>, vector<256x128xf32>
    %cst = arith.constant dense<0.000000e+00> : vector<64x128xf32>
    %2 = tpu.matmul %0, %1, %cst {dimension_numbers = #tpu.dot_dimension_numbers<[1], [0], [0], [1], [0, 0, 1, 1], [], []>} : vector<64x256xf32>, vector<256x128xf32>, vector<64x128xf32> -> vector<64x128xf32>
    %c0_3 = arith.constant 0 : index
    %c0_4 = arith.constant 0 : index
    %3 = vector.load %arg4[%c0_3, %c0_4] : memref<1x128xf32, #tpu.memory_space<vmem>>, vector<1x128xf32>
    %4 = vector.broadcast %3 : vector<1x128xf32> to vector<64x128xf32>
    %5 = arith.addf %2, %4 : vector<64x128xf32>
    %c0_5 = arith.constant 0 : index
    %c0_6 = arith.constant 0 : index
    %6 = vector.load %arg5[%c0_5, %c0_6] : memref<64x128xf32, #tpu.memory_space<vmem>>, vector<64x128xf32>
    tpu.vector_store %arg5[%c0_5, %c0_6], %5 {strides = array<i32>} : memref<64x128xf32, #tpu.memory_space<vmem>>, vector<64x128xf32>,
    return
  }
  func.func @transform_0(%arg0: i32, %arg1: i32) -> (i32, i32) {
    %c0_i32 = arith.constant 0 : i32
    %c0_i32_0 = arith.constant 0 : i32
    return %arg0, %c0_i32 : i32, i32
  }
  func.func @transform_1(%arg0: i32, %arg1: i32) -> (i32, i32) {
    %c0_i32 = arith.constant 0 : i32
    %c0_i32_0 = arith.constant 0 : i32
    return %c0_i32, %arg1 : i32, i32
  }
  func.func @transform_2(%arg0: i32, %arg1: i32) -> (i32, i32) {
    %c0_i32 = arith.constant 0 : i32
    %c0_i32_0 = arith.constant 0 : i32
    return %c0_i32, %arg1 : i32, i32
  }
  func.func @transform_3(%arg0: i32, %arg1: i32) -> (i32, i32) {
    %c0_i32 = arith.constant 0 : i32
    return %arg0, %arg1 : i32, i32
  }
}

</mosaic_0001>

<llo_original>
// kernel: tpu_custom_call.1
$region0: #{tpu_custom_call.1}
  #allocation0 [shape = 'u32[]', space=smem, size = 0x4, offset = 0x4, fixed_abs, tag = 'smem constant byte address 0x4 - core index']
  #allocation1 [shape = 'u32[144,128]{1,0:T(1,128)}', space=vmem, size = 0x12000, scoped, tag = 'internal scratch']
  %s0 = inlined_call_operand.hbm [shape: f32[64,256], index: 0, kind: input, shape index: {}]
  %s1 = inlined_call_operand.hbm [shape: f32[256,128], index: 1, kind: input, shape index: {}]
  %s2 = inlined_call_operand.vmem [shape: f32[1,128], index: 2, kind: input, shape index: {}]
  %s3 = inlined_call_operand.hbm [shape: f32[64,128], index: 3, kind: output, shape index: {}]
  %s4 = sld [smem:[#allocation0]]
  $region30: #{tpu_custom_call.1} parent=0
    _
  %s6 = ssub.s32 1, %s4
  %s7 = scalar_select 0, %s6, %s4
  $region1: #{tpu_custom_call.1} parent=0
    #allocation2 [shape = 'u8[65536]{0}', space=vmem, size = 0x10000, scoped, tag = 'input window, operand 0, single buffered']
    #allocation3 [shape = 's32[1]{0}', space=sflag, size = 0x4, scoped, tag = 'scoped memory for tpu_custom_call.1']
    #allocation4 [shape = 's32[1]{0}', space=sflag, size = 0x4, scoped, tag = 'scoped memory for tpu_custom_call.1']
    #allocation5 [shape = 'u8[131072]{0}', space=vmem, size = 0x20000, scoped, tag = 'input window, operand 1, single buffered']
    #allocation6 [shape = 's32[1]{0}', space=sflag, size = 0x4, scoped, tag = 'scoped memory for tpu_custom_call.1']
    #allocation7 [shape = 'u8[32768]{0}', space=vmem, size = 0x8000, scoped, tag = 'output window, operand 0, single buffered']
    %8 = vsyncpa [#allocation3], 0
    %9 = vsyncpa [#allocation6], 0
    %10 = vsyncpa [#allocation4], 0
    // Predicated region
    $region2: #{tpu_custom_call.1} parent=1 // pred_check
      _
    $region3: #{tpu_custom_call.1} parent=1 // pred_check_branch
      %12 = sbr.rel (0) target = $region5
    $region4: #{tpu_custom_call.1} parent=1 // pred_region
      %s14 = ssub.s32 2048, 2048
      %15 = vsyncadd [#allocation3], %s14
      %s16 = sshll.u32 [#allocation2], 4
      %s17 = int_to_ptr.vmem [resolvable:$true] %s16
      %22 = dma.hbm_to_vmem [thread:$0]  %s0, 2048, %s17, [#allocation3], 256, 256, 16
    $region5: #{tpu_custom_call.1} parent=1 // pred_fallthru
      _
    // Predicated region
    $region6: #{tpu_custom_call.1} parent=1 // pred_check
      _
    $region7: #{tpu_custom_call.1} parent=1 // pred_check_branch
      %24 = sbr.rel (0) target = $region9
    $region8: #{tpu_custom_call.1} parent=1 // pred_region
      %s26 = ssub.s32 4096, 4096
      %27 = vsyncadd [#allocation6], %s26
      %s28 = sshll.u32 [#allocation5], 4
      %s29 = int_to_ptr.vmem [resolvable:$true] %s28
      %34 = dma.hbm_to_vmem [thread:$0]  %s1, 4096, %s29, [#allocation6], 128, 128, 8
    $region9: #{tpu_custom_call.1} parent=1 // pred_fallthru
      _
    // Predicated region
    $region10: #{tpu_custom_call.1} parent=1 // pred_check
      _
    $region11: #{tpu_custom_call.1} parent=1 // pred_check_branch
      %36 = sbr.rel (0) target = $region13
    $region12: #{tpu_custom_call.1} parent=1 // pred_region
      _
    $region13: #{tpu_custom_call.1} parent=1 // pred_fallthru
      _
    // Predicated region
    $region14: #{tpu_custom_call.1} parent=1 // pred_check
      _
    $region15: #{tpu_custom_call.1} parent=1 // pred_check_branch
      %38 = sbr.rel (0) target = $region17
    $region16: #{tpu_custom_call.1} parent=1 // pred_region
      %39 = dma.done [#allocation3], 2048
    $region17: #{tpu_custom_call.1} parent=1 // pred_fallthru
      _
    // Predicated region
    $region18: #{tpu_custom_call.1} parent=1 // pred_check
      _
    $region19: #{tpu_custom_call.1} parent=1 // pred_check_branch
      %41 = sbr.rel (0) target = $region21
    $region20: #{tpu_custom_call.1} parent=1 // pred_region
      %42 = dma.done [#allocation6], 4096
    $region21: #{tpu_custom_call.1} parent=1 // pred_fallthru
      _
    %v43 = vld [vmem:[#allocation2] sm:$0xff]
    %v44 = vld [vmem:[#allocation2 + $0x8] sm:$0xff]
    %v45 = vld [vmem:[#allocation2 + $0x10] sm:$0xff]
    %v46 = vld [vmem:[#allocation2 + $0x18] sm:$0xff]
    %v47 = vld [vmem:[#allocation2 + $0x20] sm:$0xff]
    %v48 = vld [vmem:[#allocation2 + $0x28] sm:$0xff]
    %v49 = vld [vmem:[#allocation2 + $0x30] sm:$0xff]
    %v50 = vld [vmem:[#allocation2 + $0x38] sm:$0xff]
    %v51 = vld [vmem:[#allocation2 + $0x40] sm:$0xff]
    %v52 = vld [vmem:[#allocation2 + $0x48] sm:$0xff]
    %v53 = vld [vmem:[#allocation2 + $0x50] sm:$0xff]
    %v54 = vld [vmem:[#allocation2 + $0x58] sm:$0xff]
    %v55 = vld [vmem:[#allocation2 + $0x60] sm:$0xff]
    %v56 = vld [vmem:[#allocation2 + $0x68] sm:$0xff]
    %v57 = vld [vmem:[#allocation2 + $0x70] sm:$0xff]
    %v58 = vld [vmem:[#allocation2 + $0x78] sm:$0xff]
    %v59 = vld [vmem:[#allocation5] sm:$0xff]
    %v60 = vld [vmem:[#allocation5 + $0x8] sm:$0xff]
    %v61 = vld [vmem:[#allocation5 + $0x10] sm:$0xff]
    %v62 = vld [vmem:[#allocation5 + $0x18] sm:$0xff]
    %v63 = vld [vmem:[#allocation5 + $0x20] sm:$0xff]
    %v64 = vld [vmem:[#allocation5 + $0x28] sm:$0xff]
    %v65 = vld [vmem:[#allocation5 + $0x30] sm:$0xff]
    %v66 = vld [vmem:[#allocation5 + $0x38] sm:$0xff]
    %v67 = vld [vmem:[#allocation5 + $0x40] sm:$0xff]
    %v68 = vld [vmem:[#allocation5 + $0x48] sm:$0xff]
    %v69 = vld [vmem:[#allocation5 + $0x50] sm:$0xff]
    %v70 = vld [vmem:[#allocation5 + $0x58] sm:$0xff]
    %v71 = vld [vmem:[#allocation5 + $0x60] sm:$0xff]
    %v72 = vld [vmem:[#allocation5 + $0x68] sm:$0xff]
    %v73 = vld [vmem:[#allocation5 + $0x70] sm:$0xff]
    %v74 = vld [vmem:[#allocation5 + $0x78] sm:$0xff]
    %v75 = vld [vmem:[#allocation5 + $0x80] sm:$0xff]
    %v76 = vld [vmem:[#allocation5 + $0x88] sm:$0xff]
    %v77 = vld [vmem:[#allocation5 + $0x90] sm:$0xff]
    %v78 = vld [vmem:[#allocation5 + $0x98] sm:$0xff]
    %v79 = vld [vmem:[#allocation5 + $0xa0] sm:$0xff]
    %v80 = vld [vmem:[#allocation5 + $0xa8] sm:$0xff]
    %v81 = vld [vmem:[#allocation5 + $0xb0] sm:$0xff]
    %v82 = vld [vmem:[#allocation5 + $0xb8] sm:$0xff]
    %v83 = vld [vmem:[#allocation5 + $0xc0] sm:$0xff]
    %v84 = vld [vmem:[#allocation5 + $0xc8] sm:$0xff]
    %v85 = vld [vmem:[#allocation5 + $0xd0] sm:$0xff]
    %v86 = vld [vmem:[#allocation5 + $0xd8] sm:$0xff]
    %v87 = vld [vmem:[#allocation5 + $0xe0] sm:$0xff]
    %v88 = vld [vmem:[#allocation5 + $0xe8] sm:$0xff]
    %v89 = vld [vmem:[#allocation5 + $0xf0] sm:$0xff]
    %v90 = vld [vmem:[#allocation5 + $0xf8] sm:$0xff]
    %v91 = vld [vmem:[%s2] sm:$0x1]
    %v93 = vlaneseq
    %v94 = vshrl.u32 %v93, 7
    %v95 = vsub.s32 0, %v94
    %v96 = vrot.slane %v91, %v95
    %98 = vmatprep.subr.mxu0 0.0
    %99 = vmatpush1.msra.mxu0 %v59
    %100 = vmatprep.subr.mxu0 0.0
    %101 = vmatpush1.msra.mxu0 %v60
    %102 = vmatprep.subr.mxu0 0.0
    %103 = vmatpush1.msra.mxu0 %v61
    %104 = vmatprep.subr.mxu0 0.0
    %105 = vmatpush1.msra.mxu0 %v62
    %106 = vmatprep.subr.mxu0 0.0
    %107 = vmatpush1.msra.mxu0 %v63
    %108 = vmatprep.subr.mxu0 0.0
    %109 = vmatpush1.msra.mxu0 %v64
    %110 = vmatprep.subr.mxu0 0.0
    %111 = vmatpush1.msra.mxu0 %v65
    %112 = vmatprep.subr.mxu0 0.0
    %113 = vmatpush1.msra.mxu0 %v66
    %114 = vmatprep.subr.mxu0 0.0
    %115 = vmatpush1.msra.mxu0 %v67
    %116 = vmatprep.subr.mxu0 0.0
    %117 = vmatpush1.msra.mxu0 %v68
    %118 = vmatprep.subr.mxu0 0.0
    %119 = vmatpush1.msra.mxu0 %v69
    %120 = vmatprep.subr.mxu0 0.0
    %121 = vmatpush1.msra.mxu0 %v70
    %122 = vmatprep.subr.mxu0 0.0
    %123 = vmatpush1.msra.mxu0 %v71
    %124 = vmatprep.subr.mxu0 0.0
    %125 = vmatpush1.msra.mxu0 %v72
    %126 = vmatprep.subr.mxu0 0.0
    %127 = vmatpush1.msra.mxu0 %v73
    %128 = vmatprep.subr.mxu0 0.0
    %129 = vmatpush1.msra.mxu0 %v74
    %130 = vmatprep.subr.mxu0 0.0
    %131 = vmatpush1.msra.mxu0 %v75
    %132 = vmatprep.subr.mxu0 0.0
    %133 = vmatpush1.msra.mxu0 %v76
    %134 = vmatprep.subr.mxu0 0.0
    %135 = vmatpush1.msra.mxu0 %v77
    %136 = vmatprep.subr.mxu0 0.0
    %137 = vmatpush1.msra.mxu0 %v78
    %138 = vmatprep.subr.mxu0 0.0
    %139 = vmatpush1.msra.mxu0 %v79
    %140 = vmatprep.subr.mxu0 0.0
    %141 = vmatpush1.msra.mxu0 %v80
    %142 = vmatprep.subr.mxu0 0.0
    %143 = vmatpush1.msra.mxu0 %v81
    %144 = vmatprep.subr.mxu0 0.0
    %145 = vmatpush1.msra.mxu0 %v82
    %146 = vmatprep.subr.mxu0 0.0
    %147 = vmatpush1.msra.mxu0 %v83
    %148 = vmatprep.subr.mxu0 0.0
    %149 = vmatpush1.msra.mxu0 %v84
    %150 = vmatprep.subr.mxu0 0.0
    %151 = vmatpush1.msra.mxu0 %v85
    %152 = vmatprep.subr.mxu0 0.0
    %153 = vmatpush1.msra.mxu0 %v86
    %154 = vmatprep.subr.mxu0 0.0
    %155 = vmatpush1.msra.mxu0 %v87
    %156 = vmatprep.subr.mxu0 0.0
    %157 = vmatpush1.msra.mxu0 %v88
    %158 = vmatprep.subr.mxu0 0.0
    %159 = vmatpush1.msra.mxu0 %v89
    %160 = vmatprep.subr.mxu0 0.0
    %161 = vmatpush1.msra.mxu0 %v90
    %162 = vmatprep.mubr.f32.mxu0 %v44
    %163 = vmatmul.mubr.f32.gmra.mrb[0].mxu0 %v43
    %v164 = vpop.f32.mrb[0].mxu0
    %v165 = vadd.f32 %v96, %v164
    %v166 = vpop.f32.mrb[0].mxu0
    %167 = vmatprep.mubr.f32.mxu0 %v46
    %168 = vmatmul.mubr.f32.gmra.mrb[0].mxu0 %v45
    %v169 = vpop.f32.mrb[0].mxu0
    %v170 = vadd.f32 %v96, %v169
    %v171 = vpop.f32.mrb[0].mxu0
    %172 = vmatprep.mubr.f32.mxu0 %v48
    %173 = vmatmul.mubr.f32.gmra.mrb[0].mxu0 %v47
    %v174 = vpop.f32.mrb[0].mxu0
    %v175 = vadd.f32 %v96, %v174
    %v176 = vpop.f32.mrb[0].mxu0
    %177 = vmatprep.mubr.f32.mxu0 %v50
    %178 = vmatmul.mubr.f32.gmra.mrb[0].mxu0 %v49
    %v179 = vpop.f32.mrb[0].mxu0
    %v180 = vadd.f32 %v96, %v179
    %v181 = vpop.f32.mrb[0].mxu0
    %182 = vmatprep.mubr.f32.mxu0 %v52
    %183 = vmatmul.mubr.f32.gmra.mrb[0].mxu0 %v51
    %v184 = vpop.f32.mrb[0].mxu0
    %v185 = vadd.f32 %v96, %v184
    %v186 = vpop.f32.mrb[0].mxu0
    %187 = vmatprep.mubr.f32.mxu0 %v54
    %188 = vmatmul.mubr.f32.gmra.mrb[0].mxu0 %v53
    %v189 = vpop.f32.mrb[0].mxu0
    %v190 = vadd.f32 %v96, %v189
    %v191 = vpop.f32.mrb[0].mxu0
    %192 = vmatprep.mubr.f32.mxu0 %v56
    %193 = vmatmul.mubr.f32.gmra.mrb[0].mxu0 %v55
    %v194 = vpop.f32.mrb[0].mxu0
    %v195 = vadd.f32 %v96, %v194
    %v196 = vpop.f32.mrb[0].mxu0
    %197 = vmatprep.mubr.f32.mxu0 %v58
    %198 = vmatmul.mubr.f32.gmra.mrb[0].mxu0 %v57
    %v199 = vpop.f32.mrb[0].mxu0
    %v200 = vadd.f32 %v96, %v199
    %v201 = vpop.f32.mrb[0].mxu0
    %202 = vdwg.mxu0
    %203 = vst [vmem:[#allocation7] sm:$0xff] %v165
    %204 = vst [vmem:[#allocation7 + $0x8] sm:$0xff] %v170
    %205 = vst [vmem:[#allocation7 + $0x10] sm:$0xff] %v175
    %206 = vst [vmem:[#allocation7 + $0x18] sm:$0xff] %v180
    %207 = vst [vmem:[#allocation7 + $0x20] sm:$0xff] %v185
    %208 = vst [vmem:[#allocation7 + $0x28] sm:$0xff] %v190
    %209 = vst [vmem:[#allocation7 + $0x30] sm:$0xff] %v195
    %210 = vst [vmem:[#allocation7 + $0x38] sm:$0xff] %v200
    // Predicated region
    $region22: #{tpu_custom_call.1} parent=1 // pred_check
      _
    $region23: #{tpu_custom_call.1} parent=1 // pred_check_branch
      %212 = sbr.rel (0) target = $region25
    $region24: #{tpu_custom_call.1} parent=1 // pred_region
      %s214 = ssub.s32 1024, 1024
      %215 = vsyncadd [#allocation4], %s214
      %s216 = sshll.u32 [#allocation7], 4
      %s217 = int_to_ptr.vmem [resolvable:$true] %s216
      %222 = dma.vmem_to_hbm [thread:$0]  %s217, 1024, %s3, [#allocation4], 128, 128, 8
    $region25: #{tpu_custom_call.1} parent=1 // pred_fallthru
      _
    // Predicated region
    $region26: #{tpu_custom_call.1} parent=1 // pred_check
      _
    $region27: #{tpu_custom_call.1} parent=1 // pred_check_branch
      %224 = sbr.rel (0) target = $region29
    $region28: #{tpu_custom_call.1} parent=1 // pred_region
      %225 = dma.done [#allocation4], 1024
    $region29: #{tpu_custom_call.1} parent=1 // pred_fallthru
      _
    %226 = vsyncpa [#allocation3], 1
    %227 = vsyncpa [#allocation6], 1
    %228 = vsyncpa [#allocation4], 1

</llo_original>
